<compile_context>
chip_gen: v5e
topology: v5e:2x2
jax: 0.10.0
libtpu: 0.0.40
codegen_flags: <defaults>
</compile_context>

<pallas_src>
import jax
import jax.numpy as jnp
from jax import lax
from jax.experimental import pallas as pl
from jax.experimental.pallas import tpu as pltpu


def _round_up(x, m):
    return ((x + m - 1) // m) * m


def _vmem_capacity_bytes():
    try:
        return int(pltpu.get_tpu_info().vmem_capacity_bytes)
    except Exception:
        return 64 << 20  # conservative fallback: v7x per-TC VMEM


def _pick_tile_n(nbatch, ntime, budget):
    """Lane tile: multiple of 128, capped at 512 to bound vreg pressure of the
    four (tile_q, tile_n) carries, shrunk until the double-buffered resident
    times/values blocks fit the per-generation VMEM budget."""
    tn = min(512, _round_up(max(nbatch, 1), 128))
    while tn > 128 and 4 * ntime * tn * 4 > budget:
        tn //= 2
    # TODO(synk): for very long series (4*ntime*128*4 > budget) add an
    # "arbitrary" time-chunk grid axis with select-carry accumulators kept in
    # VMEM scratch, instead of keeping the whole (ntime, tile_n) block resident.
    return tn


def _make_kernel(ntime):
    static_segments = ntime <= 64  # small series: fully static slices

    def kernel(t_ref, times_ref, values_ref, out_ref):
        # t_ref/out_ref: (tile_q, tile_n);  times_ref/values_ref: (ntime, tile_n)
        t = t_ref[...].astype(jnp.float32)
        zeros = jnp.zeros_like(t)

        def select(lo_t, hi_t, lo_v, hi_v, mask, carry):
            tlo, dts, vlo, dvs = carry
            tlo = jnp.where(mask, lo_t, tlo)
            dts = jnp.where(mask, hi_t - lo_t, dts)
            vlo = jnp.where(mask, lo_v, vlo)
            dvs = jnp.where(mask, hi_v - lo_v, dvs)
            return tlo, dts, vlo, dvs

        # --- segment 0 peeled: carries the torch `t == times[0]` fix-up.
        t0 = times_ref[0:1, :].astype(jnp.float32)
        t1 = times_ref[1:2, :].astype(jnp.float32)
        v0 = values_ref[0:1, :].astype(jnp.float32)
        v1 = values_ref[1:2, :].astype(jnp.float32)
        m0 = jnp.logical_or(jnp.logical_and(t > t0, t <= t1), t == t0)
        carry = select(t0, t1, v0, v1, m0, (zeros, zeros, zeros, zeros))

        if static_segments:
            for i in range(1, ntime - 1):
                rows_t = times_ref[i:i + 2, :].astype(jnp.float32)
                rows_v = values_ref[i:i + 2, :].astype(jnp.float32)
                lo_t, hi_t = rows_t[0:1, :], rows_t[1:2, :]
                lo_v, hi_v = rows_v[0:1, :], rows_v[1:2, :]
                m = jnp.logical_and(t > lo_t, t <= hi_t)
                carry = select(lo_t, hi_t, lo_v, hi_v, m, carry)
        else:
            def body(i, c):
                rows_t = times_ref[pl.ds(i, 2), :].astype(jnp.float32)
                rows_v = values_ref[pl.ds(i, 2), :].astype(jnp.float32)
                lo_t, hi_t = rows_t[0:1, :], rows_t[1:2, :]
                lo_v, hi_v = rows_v[0:1, :], rows_v[1:2, :]
                m = jnp.logical_and(t > lo_t, t <= hi_t)
                return select(lo_t, hi_t, lo_v, hi_v, m, c)

            carry = lax.fori_loop(1, ntime - 1, body, carry, unroll=4)

        tlo, dts, vlo, dvs = carry
        # Exactly one segment matched for in-range t; zero-length segments can
        # never be selected, so dts == 0 only for out-of-range t -> guard so
        # those lanes yield 0.0 instead of NaN.
        safe_dt = jnp.where(dts == 0.0, jnp.ones_like(dts), dts)
        out = vlo + dvs * (t - tlo) / safe_dt      # single divide per lane
        out_ref[...] = out.astype(out_ref.dtype)

    return kernel


def arbitrary_interpolate(times, values, t):
    """times/values: (ntime, nbatch);  t: (nbatch,) or (nquery, nbatch)."""
    ntime, nbatch = times.shape
    squeeze = (t.ndim == 1)
    t2 = t.reshape(1, nbatch) if squeeze else t
    nquery = t2.shape[0]

    tile_q = 8
    vmem_cap = _vmem_capacity_bytes()
    tile_n = _pick_tile_n(nbatch, ntime, budget=vmem_cap // 4)

    nb_pad = _round_up(nbatch, tile_n)
    nq_pad = _round_up(nquery, tile_q)
    pad_b = nb_pad - nbatch
    pad_q = nq_pad - nquery

    # Edge-replicate padded batch columns / query rows so padded lanes stay
    # numerically benign; padded results are sliced off below.
    times_p = jnp.pad(times, ((0, 0), (0, pad_b)), mode="edge") if pad_b else times
    values_p = jnp.pad(values, ((0, 0), (0, pad_b)), mode="edge") if pad_b else values
    t_p = (jnp.pad(t2, ((0, pad_q), (0, pad_b)), mode="edge")
           if (pad_b or pad_q) else t2)

    n_bt = nb_pad // tile_n
    n_qt = nq_pad // tile_q

    # Explicit, generation-aware scoped-VMEM limit: double-buffered
    # times/values + t/out blocks, plus generous headroom for scratch.
    need = (4 * ntime * tile_n + 4 * tile_q * tile_n) * 4
    vmem_limit = int(min(int(vmem_cap * 0.9), max(32 << 20, 2 * need)))

    out = pl.pallas_call(
        _make_kernel(ntime),
        out_shape=jax.ShapeDtypeStruct((nq_pad, nb_pad), values.dtype),
        grid=(n_bt, n_qt),  # query axis innermost -> times/values stay resident
        in_specs=[
            pl.BlockSpec((tile_q, tile_n), lambda b, q: (q, b)),   # t
            pl.BlockSpec((ntime, tile_n), lambda b, q: (0, b)),    # times
            pl.BlockSpec((ntime, tile_n), lambda b, q: (0, b)),    # values
        ],
        out_specs=pl.BlockSpec((tile_q, tile_n), lambda b, q: (q, b)),
        compiler_params=pltpu.CompilerParams(
            dimension_semantics=("parallel", "parallel"),
            vmem_limit_bytes=vmem_limit),
    )(t_p, times_p, values_p)

    out = out[:nquery, :nbatch]
    return out.reshape(nbatch) if squeeze else out


class ArbitraryBatchTimeSeriesInterpolator:
    """Mirror of the torch module's interface; slopes are folded into the kernel."""

    def __init__(self, times, data):
        self.times = times          # (ntime, nbatch)
        self.values = data          # (ntime, nbatch)

    def __call__(self, t):
        return arbitrary_interpolate(self.times, self.values, t)


def _reference(times, values, t):
    """Pure-JAX mirror of the torch forward (masked sum instead of poss[locs])."""
    squeeze = (t.ndim == 1)
    tq = t[None, :] if squeeze else t                       # (nquery, nbatch)
    times_T = times.T                                        # (nbatch, ntime)
    values_T = values.T
    slopes = jnp.diff(values_T, axis=-1) / jnp.diff(times_T, axis=-1)
    tt = tq.T                                                # (nbatch, nquery)
    offsets = tt[..., :, None] - times_T[..., None, :-1]     # (nbatch, nquery, ntime-1)
    poss = slopes[..., None, :] * offsets + values_T[..., None, :-1]
    locs = jnp.logical_and(tt[..., :, None] <= times_T[..., None, 1:],
                           tt[..., :, None] > times_T[..., None, :-1])
    locs = locs.at[..., 0].set(jnp.logical_or(locs[..., 0], tt == times_T[..., 0:1]))
    out = jnp.sum(jnp.where(locs, poss, 0.0), axis=-1).T     # (nquery, nbatch)
    return out[0] if squeeze else out


if __name__ == "__main__":
    key = jax.random.PRNGKey(0)
    k1, k2, k3, k4 = jax.random.split(key, 4)

    ntime, nbatch = 16, 8

    # Per-column strictly-increasing time grids (exercises the *arbitrary*
    # per-batch search, not a shared index).
    starts = jax.random.uniform(k1, (nbatch,), minval=0.0, maxval=1.0)
    spans = jax.random.uniform(k2, (nbatch,), minval=5.0, maxval=10.0)
    frac = jnp.linspace(0.0, 1.0, ntime, dtype=jnp.float32)[:, None]
    times = (starts[None, :] + frac * spans[None, :]).astype(jnp.float32)   # (ntime, nbatch)
    values = jax.random.normal(k3, (ntime, nbatch), dtype=jnp.float32)

    interp = ArbitraryBatchTimeSeriesInterpolator(times, values)

    # Single batched query, including the t == times[0] edge case on column 0.
    u = jax.random.uniform(k4, (nbatch,), minval=0.05, maxval=0.95)
    t = (times[0] + u * (times[-1] - times[0])).astype(jnp.float32)
    t = t.at[0].set(times[0, 0])

    out = jax.block_until_ready(interp(t))
    ref = _reference(times, values, t)
    assert out.shape == (nbatch,)
    assert jnp.allclose(out, ref, atol=1e-5, rtol=1e-5), (out, ref)

    # Multiple query times (not a multiple of tile_q -> exercises query
    # padding); all queries handled in one pallas_call with times/values
    # resident in VMEM across the query grid axis.
    nquery = 5
    u2 = jax.random.uniform(jax.random.PRNGKey(7), (nquery, nbatch),
                            minval=0.05, maxval=0.95)
    t_multi = (times[0][None, :] + u2 * (times[-1] - times[0])[None, :]).astype(jnp.float32)
    out_m = jax.block_until_ready(interp(t_multi))
    ref_m = _reference(times, values, t_multi)
    assert out_m.shape == (nquery, nbatch)
    assert jnp.allclose(out_m, ref_m, atol=1e-5, rtol=1e-5), (out_m, ref_m)

    print("KERNEL_OK")
</pallas_src>

<mosaic_0001>
module attributes {stable_mosaic.version = 11 : i64} {
  func.func @kernel(%arg0: i32, %arg1: i32, %arg2: memref<8x128xf32, #tpu.memory_space<vmem>>, %arg3: memref<16x128xf32, #tpu.memory_space<vmem>>, %arg4: memref<16x128xf32, #tpu.memory_space<vmem>>, %arg5: memref<8x128xf32, #tpu.memory_space<vmem>>) attributes {dimension_semantics = [#tpu.dimension_semantics<parallel>, #tpu.dimension_semantics<parallel>], iteration_bounds = array<i64: 1, 1>, scalar_prefetch = 0 : i64, scratch_operands = 0 : i64, tpu.core_type = #tpu.core_type<tc>, window_params = [{transform_indices = @transform_0, window_bounds = array<i64: 8, 128>}, {transform_indices = @transform_1, window_bounds = array<i64: 16, 128>}, {transform_indices = @transform_2, window_bounds = array<i64: 16, 128>}, {transform_indices = @transform_3, window_bounds = array<i64: 8, 128>}]} {
    %c0 = arith.constant 0 : index
    %c0_0 = arith.constant 0 : index
    %0 = vector.load %arg2[%c0, %c0_0] : memref<8x128xf32, #tpu.memory_space<vmem>>, vector<8x128xf32>
    %cst = arith.constant 0.000000e+00 : f32
    %1 = vector.broadcast %cst : f32 to vector<8x128xf32>
    %c0_1 = arith.constant 0 : index
    %c0_2 = arith.constant 0 : index
    %2 = vector.load %arg3[%c0_1, %c0_2] : memref<16x128xf32, #tpu.memory_space<vmem>>, vector<1x128xf32>
    %c1 = arith.constant 1 : index
    %c0_3 = arith.constant 0 : index
    %3 = vector.load %arg3[%c1, %c0_3] : memref<16x128xf32, #tpu.memory_space<vmem>>, vector<1x128xf32>
    %c0_4 = arith.constant 0 : index
    %c0_5 = arith.constant 0 : index
    %4 = vector.load %arg4[%c0_4, %c0_5] : memref<16x128xf32, #tpu.memory_space<vmem>>, vector<1x128xf32>
    %c1_6 = arith.constant 1 : index
    %c0_7 = arith.constant 0 : index
    %5 = vector.load %arg4[%c1_6, %c0_7] : memref<16x128xf32, #tpu.memory_space<vmem>>, vector<1x128xf32>
    %6 = vector.broadcast %2 : vector<1x128xf32> to vector<8x128xf32>
    %7 = arith.cmpf ogt, %0, %6 : vector<8x128xf32>
    %8 = vector.broadcast %3 : vector<1x128xf32> to vector<8x128xf32>
    %9 = arith.cmpf ole, %0, %8 : vector<8x128xf32>
    %10 = arith.andi %7, %9 : vector<8x128xi1>
    %11 = vector.broadcast %2 : vector<1x128xf32> to vector<8x128xf32>
    %12 = arith.cmpf oeq, %0, %11 : vector<8x128xf32>
    %13 = arith.ori %10, %12 : vector<8x128xi1>
    %14 = vector.shape_cast %2 : vector<1x128xf32> to vector<1x128xf32>
    %15 = vector.broadcast %14 : vector<1x128xf32> to vector<8x128xf32>
    %16 = arith.select %13, %15, %1 : vector<8x128xi1>, vector<8x128xf32>
    %17 = arith.subf %3, %2 : vector<1x128xf32>
    %18 = vector.shape_cast %17 : vector<1x128xf32> to vector<1x128xf32>
    %19 = vector.broadcast %18 : vector<1x128xf32> to vector<8x128xf32>
    %20 = arith.select %13, %19, %1 : vector<8x128xi1>, vector<8x128xf32>
    %21 = vector.shape_cast %4 : vector<1x128xf32> to vector<1x128xf32>
    %22 = vector.broadcast %21 : vector<1x128xf32> to vector<8x128xf32>
    %23 = arith.select %13, %22, %1 : vector<8x128xi1>, vector<8x128xf32>
    %24 = arith.subf %5, %4 : vector<1x128xf32>
    %25 = vector.shape_cast %24 : vector<1x128xf32> to vector<1x128xf32>
    %26 = vector.broadcast %25 : vector<1x128xf32> to vector<8x128xf32>
    %27 = arith.select %13, %26, %1 : vector<8x128xi1>, vector<8x128xf32>
    %c1_8 = arith.constant 1 : index
    %c0_9 = arith.constant 0 : index
    %28 = vector.load %arg3[%c1_8, %c0_9] : memref<16x128xf32, #tpu.memory_space<vmem>>, vector<2x128xf32>
    %c1_10 = arith.constant 1 : index
    %c0_11 = arith.constant 0 : index
    %29 = vector.load %arg4[%c1_10, %c0_11] : memref<16x128xf32, #tpu.memory_space<vmem>>, vector<2x128xf32>
    %30 = vector.extract_strided_slice %28 {offsets = [0, 0], sizes = [1, 128], strides = [1, 1]} : vector<2x128xf32> to vector<1x128xf32>
    %31 = vector.extract_strided_slice %28 {offsets = [1, 0], sizes = [1, 128], strides = [1, 1]} : vector<2x128xf32> to vector<1x128xf32>
    %32 = vector.extract_strided_slice %29 {offsets = [0, 0], sizes = [1, 128], strides = [1, 1]} : vector<2x128xf32> to vector<1x128xf32>
    %33 = vector.extract_strided_slice %29 {offsets = [1, 0], sizes = [1, 128], strides = [1, 1]} : vector<2x128xf32> to vector<1x128xf32>
    %34 = vector.broadcast %30 : vector<1x128xf32> to vector<8x128xf32>
    %35 = arith.cmpf ogt, %0, %34 : vector<8x128xf32>
    %36 = vector.broadcast %31 : vector<1x128xf32> to vector<8x128xf32>
    %37 = arith.cmpf ole, %0, %36 : vector<8x128xf32>
    %38 = arith.andi %35, %37 : vector<8x128xi1>
    %39 = vector.shape_cast %30 : vector<1x128xf32> to vector<1x128xf32>
    %40 = vector.broadcast %39 : vector<1x128xf32> to vector<8x128xf32>
    %41 = arith.select %38, %40, %16 : vector<8x128xi1>, vector<8x128xf32>
    %42 = arith.subf %31, %30 : vector<1x128xf32>
    %43 = vector.shape_cast %42 : vector<1x128xf32> to vector<1x128xf32>
    %44 = vector.broadcast %43 : vector<1x128xf32> to vector<8x128xf32>
    %45 = arith.select %38, %44, %20 : vector<8x128xi1>, vector<8x128xf32>
    %46 = vector.shape_cast %32 : vector<1x128xf32> to vector<1x128xf32>
    %47 = vector.broadcast %46 : vector<1x128xf32> to vector<8x128xf32>
    %48 = arith.select %38, %47, %23 : vector<8x128xi1>, vector<8x128xf32>
    %49 = arith.subf %33, %32 : vector<1x128xf32>
    %50 = vector.shape_cast %49 : vector<1x128xf32> to vector<1x128xf32>
    %51 = vector.broadcast %50 : vector<1x128xf32> to vector<8x128xf32>
    %52 = arith.select %38, %51, %27 : vector<8x128xi1>, vector<8x128xf32>
    %c2 = arith.constant 2 : index
    %c0_12 = arith.constant 0 : index
    %53 = vector.load %arg3[%c2, %c0_12] : memref<16x128xf32, #tpu.memory_space<vmem>>, vector<2x128xf32>
    %c2_13 = arith.constant 2 : index
    %c0_14 = arith.constant 0 : index
    %54 = vector.load %arg4[%c2_13, %c0_14] : memref<16x128xf32, #tpu.memory_space<vmem>>, vector<2x128xf32>
    %55 = vector.extract_strided_slice %53 {offsets = [0, 0], sizes = [1, 128], strides = [1, 1]} : vector<2x128xf32> to vector<1x128xf32>
    %56 = vector.extract_strided_slice %53 {offsets = [1, 0], sizes = [1, 128], strides = [1, 1]} : vector<2x128xf32> to vector<1x128xf32>
    %57 = vector.extract_strided_slice %54 {offsets = [0, 0], sizes = [1, 128], strides = [1, 1]} : vector<2x128xf32> to vector<1x128xf32>
    %58 = vector.extract_strided_slice %54 {offsets = [1, 0], sizes = [1, 128], strides = [1, 1]} : vector<2x128xf32> to vector<1x128xf32>
    %59 = vector.broadcast %55 : vector<1x128xf32> to vector<8x128xf32>
    %60 = arith.cmpf ogt, %0, %59 : vector<8x128xf32>
    %61 = vector.broadcast %56 : vector<1x128xf32> to vector<8x128xf32>
    %62 = arith.cmpf ole, %0, %61 : vector<8x128xf32>
    %63 = arith.andi %60, %62 : vector<8x128xi1>
    %64 = vector.shape_cast %55 : vector<1x128xf32> to vector<1x128xf32>
    %65 = vector.broadcast %64 : vector<1x128xf32> to vector<8x128xf32>
    %66 = arith.select %63, %65, %41 : vector<8x128xi1>, vector<8x128xf32>
    %67 = arith.subf %56, %55 : vector<1x128xf32>
    %68 = vector.shape_cast %67 : vector<1x128xf32> to vector<1x128xf32>
    %69 = vector.broadcast %68 : vector<1x128xf32> to vector<8x128xf32>
    %70 = arith.select %63, %69, %45 : vector<8x128xi1>, vector<8x128xf32>
    %71 = vector.shape_cast %57 : vector<1x128xf32> to vector<1x128xf32>
    %72 = vector.broadcast %71 : vector<1x128xf32> to vector<8x128xf32>
    %73 = arith.select %63, %72, %48 : vector<8x128xi1>, vector<8x128xf32>
    %74 = arith.subf %58, %57 : vector<1x128xf32>
    %75 = vector.shape_cast %74 : vector<1x128xf32> to vector<1x128xf32>
    %76 = vector.broadcast %75 : vector<1x128xf32> to vector<8x128xf32>
    %77 = arith.select %63, %76, %52 : vector<8x128xi1>, vector<8x128xf32>
    %c3 = arith.constant 3 : index
    %c0_15 = arith.constant 0 : index
    %78 = vector.load %arg3[%c3, %c0_15] : memref<16x128xf32, #tpu.memory_space<vmem>>, vector<2x128xf32>
    %c3_16 = arith.constant 3 : index
    %c0_17 = arith.constant 0 : index
    %79 = vector.load %arg4[%c3_16, %c0_17] : memref<16x128xf32, #tpu.memory_space<vmem>>, vector<2x128xf32>
    %80 = vector.extract_strided_slice %78 {offsets = [0, 0], sizes = [1, 128], strides = [1, 1]} : vector<2x128xf32> to vector<1x128xf32>
    %81 = vector.extract_strided_slice %78 {offsets = [1, 0], sizes = [1, 128], strides = [1, 1]} : vector<2x128xf32> to vector<1x128xf32>
    %82 = vector.extract_strided_slice %79 {offsets = [0, 0], sizes = [1, 128], strides = [1, 1]} : vector<2x128xf32> to vector<1x128xf32>
    %83 = vector.extract_strided_slice %79 {offsets = [1, 0], sizes = [1, 128], strides = [1, 1]} : vector<2x128xf32> to vector<1x128xf32>
    %84 = vector.broadcast %80 : vector<1x128xf32> to vector<8x128xf32>
    %85 = arith.cmpf ogt, %0, %84 : vector<8x128xf32>
    %86 = vector.broadcast %81 : vector<1x128xf32> to vector<8x128xf32>
    %87 = arith.cmpf ole, %0, %86 : vector<8x128xf32>
    %88 = arith.andi %85, %87 : vector<8x128xi1>
    %89 = vector.shape_cast %80 : vector<1x128xf32> to vector<1x128xf32>
    %90 = vector.broadcast %89 : vector<1x128xf32> to vector<8x128xf32>
    %91 = arith.select %88, %90, %66 : vector<8x128xi1>, vector<8x128xf32>
    %92 = arith.subf %81, %80 : vector<1x128xf32>
    %93 = vector.shape_cast %92 : vector<1x128xf32> to vector<1x128xf32>
    %94 = vector.broadcast %93 : vector<1x128xf32> to vector<8x128xf32>
    %95 = arith.select %88, %94, %70 : vector<8x128xi1>, vector<8x128xf32>
    %96 = vector.shape_cast %82 : vector<1x128xf32> to vector<1x128xf32>
    %97 = vector.broadcast %96 : vector<1x128xf32> to vector<8x128xf32>
    %98 = arith.select %88, %97, %73 : vector<8x128xi1>, vector<8x128xf32>
    %99 = arith.subf %83, %82 : vector<1x128xf32>
    %100 = vector.shape_cast %99 : vector<1x128xf32> to vector<1x128xf32>
    %101 = vector.broadcast %100 : vector<1x128xf32> to vector<8x128xf32>
    %102 = arith.select %88, %101, %77 : vector<8x128xi1>, vector<8x128xf32>
    %c4 = arith.constant 4 : index
    %c0_18 = arith.constant 0 : index
    %103 = vector.load %arg3[%c4, %c0_18] : memref<16x128xf32, #tpu.memory_space<vmem>>, vector<2x128xf32>
    %c4_19 = arith.constant 4 : index
    %c0_20 = arith.constant 0 : index
    %104 = vector.load %arg4[%c4_19, %c0_20] : memref<16x128xf32, #tpu.memory_space<vmem>>, vector<2x128xf32>
    %105 = vector.extract_strided_slice %103 {offsets = [0, 0], sizes = [1, 128], strides = [1, 1]} : vector<2x128xf32> to vector<1x128xf32>
    %106 = vector.extract_strided_slice %103 {offsets = [1, 0], sizes = [1, 128], strides = [1, 1]} : vector<2x128xf32> to vector<1x128xf32>
    %107 = vector.extract_strided_slice %104 {offsets = [0, 0], sizes = [1, 128], strides = [1, 1]} : vector<2x128xf32> to vector<1x128xf32>
    %108 = vector.extract_strided_slice %104 {offsets = [1, 0], sizes = [1, 128], strides = [1, 1]} : vector<2x128xf32> to vector<1x128xf32>
    %109 = vector.broadcast %105 : vector<1x128xf32> to vector<8x128xf32>
    %110 = arith.cmpf ogt, %0, %109 : vector<8x128xf32>
    %111 = vector.broadcast %106 : vector<1x128xf32> to vector<8x128xf32>
    %112 = arith.cmpf ole, %0, %111 : vector<8x128xf32>
    %113 = arith.andi %110, %112 : vector<8x128xi1>
    %114 = vector.shape_cast %105 : vector<1x128xf32> to vector<1x128xf32>
    %115 = vector.broadcast %114 : vector<1x128xf32> to vector<8x128xf32>
    %116 = arith.select %113, %115, %91 : vector<8x128xi1>, vector<8x128xf32>
    %117 = arith.subf %106, %105 : vector<1x128xf32>
    %118 = vector.shape_cast %117 : vector<1x128xf32> to vector<1x128xf32>
    %119 = vector.broadcast %118 : vector<1x128xf32> to vector<8x128xf32>
    %120 = arith.select %113, %119, %95 : vector<8x128xi1>, vector<8x128xf32>
    %121 = vector.shape_cast %107 : vector<1x128xf32> to vector<1x128xf32>
    %122 = vector.broadcast %121 : vector<1x128xf32> to vector<8x128xf32>
    %123 = arith.select %113, %122, %98 : vector<8x128xi1>, vector<8x128xf32>
    %124 = arith.subf %108, %107 : vector<1x128xf32>
    %125 = vector.shape_cast %124 : vector<1x128xf32> to vector<1x128xf32>
    %126 = vector.broadcast %125 : vector<1x128xf32> to vector<8x128xf32>
    %127 = arith.select %113, %126, %102 : vector<8x128xi1>, vector<8x128xf32>
    %c5 = arith.constant 5 : index
    %c0_21 = arith.constant 0 : index
    %128 = vector.load %arg3[%c5, %c0_21] : memref<16x128xf32, #tpu.memory_space<vmem>>, vector<2x128xf32>
    %c5_22 = arith.constant 5 : index
    %c0_23 = arith.constant 0 : index
    %129 = vector.load %arg4[%c5_22, %c0_23] : memref<16x128xf32, #tpu.memory_space<vmem>>, vector<2x128xf32>
    %130 = vector.extract_strided_slice %128 {offsets = [0, 0], sizes = [1, 128], strides = [1, 1]} : vector<2x128xf32> to vector<1x128xf32>
    %131 = vector.extract_strided_slice %128 {offsets = [1, 0], sizes = [1, 128], strides = [1, 1]} : vector<2x128xf32> to vector<1x128xf32>
    %132 = vector.extract_strided_slice %129 {offsets = [0, 0], sizes = [1, 128], strides = [1, 1]} : vector<2x128xf32> to vector<1x128xf32>
    %133 = vector.extract_strided_slice %129 {offsets = [1, 0], sizes = [1, 128], strides = [1, 1]} : vector<2x128xf32> to vector<1x128xf32>
    %134 = vector.broadcast %130 : vector<1x128xf32> to vector<8x128xf32>
    %135 = arith.cmpf ogt, %0, %134 : vector<8x128xf32>
    %136 = vector.broadcast %131 : vector<1x128xf32> to vector<8x128xf32>
    %137 = arith.cmpf ole, %0, %136 : vector<8x128xf32>
    %138 = arith.andi %135, %137 : vector<8x128xi1>
    %139 = vector.shape_cast %130 : vector<1x128xf32> to vector<1x128xf32>
    %140 = vector.broadcast %139 : vector<1x128xf32> to vector<8x128xf32>
    %141 = arith.select %138, %140, %116 : vector<8x128xi1>, vector<8x128xf32>
    %142 = arith.subf %131, %130 : vector<1x128xf32>
    %143 = vector.shape_cast %142 : vector<1x128xf32> to vector<1x128xf32>
    %144 = vector.broadcast %143 : vector<1x128xf32> to vector<8x128xf32>
    %145 = arith.select %138, %144, %120 : vector<8x128xi1>, vector<8x128xf32>
    %146 = vector.shape_cast %132 : vector<1x128xf32> to vector<1x128xf32>
    %147 = vector.broadcast %146 : vector<1x128xf32> to vector<8x128xf32>
    %148 = arith.select %138, %147, %123 : vector<8x128xi1>, vector<8x128xf32>
    %149 = arith.subf %133, %132 : vector<1x128xf32>
    %150 = vector.shape_cast %149 : vector<1x128xf32> to vector<1x128xf32>
    %151 = vector.broadcast %150 : vector<1x128xf32> to vector<8x128xf32>
    %152 = arith.select %138, %151, %127 : vector<8x128xi1>, vector<8x128xf32>
    %c6 = arith.constant 6 : index
    %c0_24 = arith.constant 0 : index
    %153 = vector.load %arg3[%c6, %c0_24] : memref<16x128xf32, #tpu.memory_space<vmem>>, vector<2x128xf32>
    %c6_25 = arith.constant 6 : index
    %c0_26 = arith.constant 0 : index
    %154 = vector.load %arg4[%c6_25, %c0_26] : memref<16x128xf32, #tpu.memory_space<vmem>>, vector<2x128xf32>
    %155 = vector.extract_strided_slice %153 {offsets = [0, 0], sizes = [1, 128], strides = [1, 1]} : vector<2x128xf32> to vector<1x128xf32>
    %156 = vector.extract_strided_slice %153 {offsets = [1, 0], sizes = [1, 128], strides = [1, 1]} : vector<2x128xf32> to vector<1x128xf32>
    %157 = vector.extract_strided_slice %154 {offsets = [0, 0], sizes = [1, 128], strides = [1, 1]} : vector<2x128xf32> to vector<1x128xf32>
    %158 = vector.extract_strided_slice %154 {offsets = [1, 0], sizes = [1, 128], strides = [1, 1]} : vector<2x128xf32> to vector<1x128xf32>
    %159 = vector.broadcast %155 : vector<1x128xf32> to vector<8x128xf32>
    %160 = arith.cmpf ogt, %0, %159 : vector<8x128xf32>
    %161 = vector.broadcast %156 : vector<1x128xf32> to vector<8x128xf32>
    %162 = arith.cmpf ole, %0, %161 : vector<8x128xf32>
    %163 = arith.andi %160, %162 : vector<8x128xi1>
    %164 = vector.shape_cast %155 : vector<1x128xf32> to vector<1x128xf32>
    %165 = vector.broadcast %164 : vector<1x128xf32> to vector<8x128xf32>
    %166 = arith.select %163, %165, %141 : vector<8x128xi1>, vector<8x128xf32>
    %167 = arith.subf %156, %155 : vector<1x128xf32>
    %168 = vector.shape_cast %167 : vector<1x128xf32> to vector<1x128xf32>
    %169 = vector.broadcast %168 : vector<1x128xf32> to vector<8x128xf32>
    %170 = arith.select %163, %169, %145 : vector<8x128xi1>, vector<8x128xf32>
    %171 = vector.shape_cast %157 : vector<1x128xf32> to vector<1x128xf32>
    %172 = vector.broadcast %171 : vector<1x128xf32> to vector<8x128xf32>
    %173 = arith.select %163, %172, %148 : vector<8x128xi1>, vector<8x128xf32>
    %174 = arith.subf %158, %157 : vector<1x128xf32>
    %175 = vector.shape_cast %174 : vector<1x128xf32> to vector<1x128xf32>
    %176 = vector.broadcast %175 : vector<1x128xf32> to vector<8x128xf32>
    %177 = arith.select %163, %176, %152 : vector<8x128xi1>, vector<8x128xf32>
    %c7 = arith.constant 7 : index
    %c0_27 = arith.constant 0 : index
    %178 = vector.load %arg3[%c7, %c0_27] : memref<16x128xf32, #tpu.memory_space<vmem>>, vector<2x128xf32>
    %c7_28 = arith.constant 7 : index
    %c0_29 = arith.constant 0 : index
    %179 = vector.load %arg4[%c7_28, %c0_29] : memref<16x128xf32, #tpu.memory_space<vmem>>, vector<2x128xf32>
    %180 = vector.extract_strided_slice %178 {offsets = [0, 0], sizes = [1, 128], strides = [1, 1]} : vector<2x128xf32> to vector<1x128xf32>
    %181 = vector.extract_strided_slice %178 {offsets = [1, 0], sizes = [1, 128], strides = [1, 1]} : vector<2x128xf32> to vector<1x128xf32>
    %182 = vector.extract_strided_slice %179 {offsets = [0, 0], sizes = [1, 128], strides = [1, 1]} : vector<2x128xf32> to vector<1x128xf32>
    %183 = vector.extract_strided_slice %179 {offsets = [1, 0], sizes = [1, 128], strides = [1, 1]} : vector<2x128xf32> to vector<1x128xf32>
    %184 = vector.broadcast %180 : vector<1x128xf32> to vector<8x128xf32>
    %185 = arith.cmpf ogt, %0, %184 : vector<8x128xf32>
    %186 = vector.broadcast %181 : vector<1x128xf32> to vector<8x128xf32>
    %187 = arith.cmpf ole, %0, %186 : vector<8x128xf32>
    %188 = arith.andi %185, %187 : vector<8x128xi1>
    %189 = vector.shape_cast %180 : vector<1x128xf32> to vector<1x128xf32>
    %190 = vector.broadcast %189 : vector<1x128xf32> to vector<8x128xf32>
    %191 = arith.select %188, %190, %166 : vector<8x128xi1>, vector<8x128xf32>
    %192 = arith.subf %181, %180 : vector<1x128xf32>
    %193 = vector.shape_cast %192 : vector<1x128xf32> to vector<1x128xf32>
    %194 = vector.broadcast %193 : vector<1x128xf32> to vector<8x128xf32>
    %195 = arith.select %188, %194, %170 : vector<8x128xi1>, vector<8x128xf32>
    %196 = vector.shape_cast %182 : vector<1x128xf32> to vector<1x128xf32>
    %197 = vector.broadcast %196 : vector<1x128xf32> to vector<8x128xf32>
    %198 = arith.select %188, %197, %173 : vector<8x128xi1>, vector<8x128xf32>
    %199 = arith.subf %183, %182 : vector<1x128xf32>
    %200 = vector.shape_cast %199 : vector<1x128xf32> to vector<1x128xf32>
    %201 = vector.broadcast %200 : vector<1x128xf32> to vector<8x128xf32>
    %202 = arith.select %188, %201, %177 : vector<8x128xi1>, vector<8x128xf32>
    %c8 = arith.constant 8 : index
    %c0_30 = arith.constant 0 : index
    %203 = vector.load %arg3[%c8, %c0_30] : memref<16x128xf32, #tpu.memory_space<vmem>>, vector<2x128xf32>
    %c8_31 = arith.constant 8 : index
    %c0_32 = arith.constant 0 : index
    %204 = vector.load %arg4[%c8_31, %c0_32] : memref<16x128xf32, #tpu.memory_space<vmem>>, vector<2x128xf32>
    %205 = vector.extract_strided_slice %203 {offsets = [0, 0], sizes = [1, 128], strides = [1, 1]} : vector<2x128xf32> to vector<1x128xf32>
    %206 = vector.extract_strided_slice %203 {offsets = [1, 0], sizes = [1, 128], strides = [1, 1]} : vector<2x128xf32> to vector<1x128xf32>
    %207 = vector.extract_strided_slice %204 {offsets = [0, 0], sizes = [1, 128], strides = [1, 1]} : vector<2x128xf32> to vector<1x128xf32>
    %208 = vector.extract_strided_slice %204 {offsets = [1, 0], sizes = [1, 128], strides = [1, 1]} : vector<2x128xf32> to vector<1x128xf32>
    %209 = vector.broadcast %205 : vector<1x128xf32> to vector<8x128xf32>
    %210 = arith.cmpf ogt, %0, %209 : vector<8x128xf32>
    %211 = vector.broadcast %206 : vector<1x128xf32> to vector<8x128xf32>
    %212 = arith.cmpf ole, %0, %211 : vector<8x128xf32>
    %213 = arith.andi %210, %212 : vector<8x128xi1>
    %214 = vector.shape_cast %205 : vector<1x128xf32> to vector<1x128xf32>
    %215 = vector.broadcast %214 : vector<1x128xf32> to vector<8x128xf32>
    %216 = arith.select %213, %215, %191 : vector<8x128xi1>, vector<8x128xf32>
    %217 = arith.subf %206, %205 : vector<1x128xf32>
    %218 = vector.shape_cast %217 : vector<1x128xf32> to vector<1x128xf32>
    %219 = vector.broadcast %218 : vector<1x128xf32> to vector<8x128xf32>
    %220 = arith.select %213, %219, %195 : vector<8x128xi1>, vector<8x128xf32>
    %221 = vector.shape_cast %207 : vector<1x128xf32> to vector<1x128xf32>
    %222 = vector.broadcast %221 : vector<1x128xf32> to vector<8x128xf32>
    %223 = arith.select %213, %222, %198 : vector<8x128xi1>, vector<8x128xf32>
    %224 = arith.subf %208, %207 : vector<1x128xf32>
    %225 = vector.shape_cast %224 : vector<1x128xf32> to vector<1x128xf32>
    %226 = vector.broadcast %225 : vector<1x128xf32> to vector<8x128xf32>
    %227 = arith.select %213, %226, %202 : vector<8x128xi1>, vector<8x128xf32>
    %c9 = arith.constant 9 : index
    %c0_33 = arith.constant 0 : index
    %228 = vector.load %arg3[%c9, %c0_33] : memref<16x128xf32, #tpu.memory_space<vmem>>, vector<2x128xf32>
    %c9_34 = arith.constant 9 : index
    %c0_35 = arith.constant 0 : index
    %229 = vector.load %arg4[%c9_34, %c0_35] : memref<16x128xf32, #tpu.memory_space<vmem>>, vector<2x128xf32>
    %230 = vector.extract_strided_slice %228 {offsets = [0, 0], sizes = [1, 128], strides = [1, 1]} : vector<2x128xf32> to vector<1x128xf32>
    %231 = vector.extract_strided_slice %228 {offsets = [1, 0], sizes = [1, 128], strides = [1, 1]} : vector<2x128xf32> to vector<1x128xf32>
    %232 = vector.extract_strided_slice %229 {offsets = [0, 0], sizes = [1, 128], strides = [1, 1]} : vector<2x128xf32> to vector<1x128xf32>
    %233 = vector.extract_strided_slice %229 {offsets = [1, 0], sizes = [1, 128], strides = [1, 1]} : vector<2x128xf32> to vector<1x128xf32>
    %234 = vector.broadcast %230 : vector<1x128xf32> to vector<8x128xf32>
    %235 = arith.cmpf ogt, %0, %234 : vector<8x128xf32>
    %236 = vector.broadcast %231 : vector<1x128xf32> to vector<8x128xf32>
    %237 = arith.cmpf ole, %0, %236 : vector<8x128xf32>
    %238 = arith.andi %235, %237 : vector<8x128xi1>
    %239 = vector.shape_cast %230 : vector<1x128xf32> to vector<1x128xf32>
    %240 = vector.broadcast %239 : vector<1x128xf32> to vector<8x128xf32>
    %241 = arith.select %238, %240, %216 : vector<8x128xi1>, vector<8x128xf32>
    %242 = arith.subf %231, %230 : vector<1x128xf32>
    %243 = vector.shape_cast %242 : vector<1x128xf32> to vector<1x128xf32>
    %244 = vector.broadcast %243 : vector<1x128xf32> to vector<8x128xf32>
    %245 = arith.select %238, %244, %220 : vector<8x128xi1>, vector<8x128xf32>
    %246 = vector.shape_cast %232 : vector<1x128xf32> to vector<1x128xf32>
    %247 = vector.broadcast %246 : vector<1x128xf32> to vector<8x128xf32>
    %248 = arith.select %238, %247, %223 : vector<8x128xi1>, vector<8x128xf32>
    %249 = arith.subf %233, %232 : vector<1x128xf32>
    %250 = vector.shape_cast %249 : vector<1x128xf32> to vector<1x128xf32>
    %251 = vector.broadcast %250 : vector<1x128xf32> to vector<8x128xf32>
    %252 = arith.select %238, %251, %227 : vector<8x128xi1>, vector<8x128xf32>
    %c10 = arith.constant 10 : index
    %c0_36 = arith.constant 0 : index
    %253 = vector.load %arg3[%c10, %c0_36] : memref<16x128xf32, #tpu.memory_space<vmem>>, vector<2x128xf32>
    %c10_37 = arith.constant 10 : index
    %c0_38 = arith.constant 0 : index
    %254 = vector.load %arg4[%c10_37, %c0_38] : memref<16x128xf32, #tpu.memory_space<vmem>>, vector<2x128xf32>
    %255 = vector.extract_strided_slice %253 {offsets = [0, 0], sizes = [1, 128], strides = [1, 1]} : vector<2x128xf32> to vector<1x128xf32>
    %256 = vector.extract_strided_slice %253 {offsets = [1, 0], sizes = [1, 128], strides = [1, 1]} : vector<2x128xf32> to vector<1x128xf32>
    %257 = vector.extract_strided_slice %254 {offsets = [0, 0], sizes = [1, 128], strides = [1, 1]} : vector<2x128xf32> to vector<1x128xf32>
    %258 = vector.extract_strided_slice %254 {offsets = [1, 0], sizes = [1, 128], strides = [1, 1]} : vector<2x128xf32> to vector<1x128xf32>
    %259 = vector.broadcast %255 : vector<1x128xf32> to vector<8x128xf32>
    %260 = arith.cmpf ogt, %0, %259 : vector<8x128xf32>
    %261 = vector.broadcast %256 : vector<1x128xf32> to vector<8x128xf32>
    %262 = arith.cmpf ole, %0, %261 : vector<8x128xf32>
    %263 = arith.andi %260, %262 : vector<8x128xi1>
    %264 = vector.shape_cast %255 : vector<1x128xf32> to vector<1x128xf32>
    %265 = vector.broadcast %264 : vector<1x128xf32> to vector<8x128xf32>
    %266 = arith.select %263, %265, %241 : vector<8x128xi1>, vector<8x128xf32>
    %267 = arith.subf %256, %255 : vector<1x128xf32>
    %268 = vector.shape_cast %267 : vector<1x128xf32> to vector<1x128xf32>
    %269 = vector.broadcast %268 : vector<1x128xf32> to vector<8x128xf32>
    %270 = arith.select %263, %269, %245 : vector<8x128xi1>, vector<8x128xf32>
    %271 = vector.shape_cast %257 : vector<1x128xf32> to vector<1x128xf32>
    %272 = vector.broadcast %271 : vector<1x128xf32> to vector<8x128xf32>
    %273 = arith.select %263, %272, %248 : vector<8x128xi1>, vector<8x128xf32>
    %274 = arith.subf %258, %257 : vector<1x128xf32>
    %275 = vector.shape_cast %274 : vector<1x128xf32> to vector<1x128xf32>
    %276 = vector.broadcast %275 : vector<1x128xf32> to vector<8x128xf32>
    %277 = arith.select %263, %276, %252 : vector<8x128xi1>, vector<8x128xf32>
    %c11 = arith.constant 11 : index
    %c0_39 = arith.constant 0 : index
    %278 = vector.load %arg3[%c11, %c0_39] : memref<16x128xf32, #tpu.memory_space<vmem>>, vector<2x128xf32>
    %c11_40 = arith.constant 11 : index
    %c0_41 = arith.constant 0 : index
    %279 = vector.load %arg4[%c11_40, %c0_41] : memref<16x128xf32, #tpu.memory_space<vmem>>, vector<2x128xf32>
    %280 = vector.extract_strided_slice %278 {offsets = [0, 0], sizes = [1, 128], strides = [1, 1]} : vector<2x128xf32> to vector<1x128xf32>
    %281 = vector.extract_strided_slice %278 {offsets = [1, 0], sizes = [1, 128], strides = [1, 1]} : vector<2x128xf32> to vector<1x128xf32>
    %282 = vector.extract_strided_slice %279 {offsets = [0, 0], sizes = [1, 128], strides = [1, 1]} : vector<2x128xf32> to vector<1x128xf32>
    %283 = vector.extract_strided_slice %279 {offsets = [1, 0], sizes = [1, 128], strides = [1, 1]} : vector<2x128xf32> to vector<1x128xf32>
    %284 = vector.broadcast %280 : vector<1x128xf32> to vector<8x128xf32>
    %285 = arith.cmpf ogt, %0, %284 : vector<8x128xf32>
    %286 = vector.broadcast %281 : vector<1x128xf32> to vector<8x128xf32>
    %287 = arith.cmpf ole, %0, %286 : vector<8x128xf32>
    %288 = arith.andi %285, %287 : vector<8x128xi1>
    %289 = vector.shape_cast %280 : vector<1x128xf32> to vector<1x128xf32>
    %290 = vector.broadcast %289 : vector<1x128xf32> to vector<8x128xf32>
    %291 = arith.select %288, %290, %266 : vector<8x128xi1>, vector<8x128xf32>
    %292 = arith.subf %281, %280 : vector<1x128xf32>
    %293 = vector.shape_cast %292 : vector<1x128xf32> to vector<1x128xf32>
    %294 = vector.broadcast %293 : vector<1x128xf32> to vector<8x128xf32>
    %295 = arith.select %288, %294, %270 : vector<8x128xi1>, vector<8x128xf32>
    %296 = vector.shape_cast %282 : vector<1x128xf32> to vector<1x128xf32>
    %297 = vector.broadcast %296 : vector<1x128xf32> to vector<8x128xf32>
    %298 = arith.select %288, %297, %273 : vector<8x128xi1>, vector<8x128xf32>
    %299 = arith.subf %283, %282 : vector<1x128xf32>
    %300 = vector.shape_cast %299 : vector<1x128xf32> to vector<1x128xf32>
    %301 = vector.broadcast %300 : vector<1x128xf32> to vector<8x128xf32>
    %302 = arith.select %288, %301, %277 : vector<8x128xi1>, vector<8x128xf32>
    %c12 = arith.constant 12 : index
    %c0_42 = arith.constant 0 : index
    %303 = vector.load %arg3[%c12, %c0_42] : memref<16x128xf32, #tpu.memory_space<vmem>>, vector<2x128xf32>
    %c12_43 = arith.constant 12 : index
    %c0_44 = arith.constant 0 : index
    %304 = vector.load %arg4[%c12_43, %c0_44] : memref<16x128xf32, #tpu.memory_space<vmem>>, vector<2x128xf32>
    %305 = vector.extract_strided_slice %303 {offsets = [0, 0], sizes = [1, 128], strides = [1, 1]} : vector<2x128xf32> to vector<1x128xf32>
    %306 = vector.extract_strided_slice %303 {offsets = [1, 0], sizes = [1, 128], strides = [1, 1]} : vector<2x128xf32> to vector<1x128xf32>
    %307 = vector.extract_strided_slice %304 {offsets = [0, 0], sizes = [1, 128], strides = [1, 1]} : vector<2x128xf32> to vector<1x128xf32>
    %308 = vector.extract_strided_slice %304 {offsets = [1, 0], sizes = [1, 128], strides = [1, 1]} : vector<2x128xf32> to vector<1x128xf32>
    %309 = vector.broadcast %305 : vector<1x128xf32> to vector<8x128xf32>
    %310 = arith.cmpf ogt, %0, %309 : vector<8x128xf32>
    %311 = vector.broadcast %306 : vector<1x128xf32> to vector<8x128xf32>
    %312 = arith.cmpf ole, %0, %311 : vector<8x128xf32>
    %313 = arith.andi %310, %312 : vector<8x128xi1>
    %314 = vector.shape_cast %305 : vector<1x128xf32> to vector<1x128xf32>
    %315 = vector.broadcast %314 : vector<1x128xf32> to vector<8x128xf32>
    %316 = arith.select %313, %315, %291 : vector<8x128xi1>, vector<8x128xf32>
    %317 = arith.subf %306, %305 : vector<1x128xf32>
    %318 = vector.shape_cast %317 : vector<1x128xf32> to vector<1x128xf32>
    %319 = vector.broadcast %318 : vector<1x128xf32> to vector<8x128xf32>
    %320 = arith.select %313, %319, %295 : vector<8x128xi1>, vector<8x128xf32>
    %321 = vector.shape_cast %307 : vector<1x128xf32> to vector<1x128xf32>
    %322 = vector.broadcast %321 : vector<1x128xf32> to vector<8x128xf32>
    %323 = arith.select %313, %322, %298 : vector<8x128xi1>, vector<8x128xf32>
    %324 = arith.subf %308, %307 : vector<1x128xf32>
    %325 = vector.shape_cast %324 : vector<1x128xf32> to vector<1x128xf32>
    %326 = vector.broadcast %325 : vector<1x128xf32> to vector<8x128xf32>
    %327 = arith.select %313, %326, %302 : vector<8x128xi1>, vector<8x128xf32>
    %c13 = arith.constant 13 : index
    %c0_45 = arith.constant 0 : index
    %328 = vector.load %arg3[%c13, %c0_45] : memref<16x128xf32, #tpu.memory_space<vmem>>, vector<2x128xf32>
    %c13_46 = arith.constant 13 : index
    %c0_47 = arith.constant 0 : index
    %329 = vector.load %arg4[%c13_46, %c0_47] : memref<16x128xf32, #tpu.memory_space<vmem>>, vector<2x128xf32>
    %330 = vector.extract_strided_slice %328 {offsets = [0, 0], sizes = [1, 128], strides = [1, 1]} : vector<2x128xf32> to vector<1x128xf32>
    %331 = vector.extract_strided_slice %328 {offsets = [1, 0], sizes = [1, 128], strides = [1, 1]} : vector<2x128xf32> to vector<1x128xf32>
    %332 = vector.extract_strided_slice %329 {offsets = [0, 0], sizes = [1, 128], strides = [1, 1]} : vector<2x128xf32> to vector<1x128xf32>
    %333 = vector.extract_strided_slice %329 {offsets = [1, 0], sizes = [1, 128], strides = [1, 1]} : vector<2x128xf32> to vector<1x128xf32>
    %334 = vector.broadcast %330 : vector<1x128xf32> to vector<8x128xf32>
    %335 = arith.cmpf ogt, %0, %334 : vector<8x128xf32>
    %336 = vector.broadcast %331 : vector<1x128xf32> to vector<8x128xf32>
    %337 = arith.cmpf ole, %0, %336 : vector<8x128xf32>
    %338 = arith.andi %335, %337 : vector<8x128xi1>
    %339 = vector.shape_cast %330 : vector<1x128xf32> to vector<1x128xf32>
    %340 = vector.broadcast %339 : vector<1x128xf32> to vector<8x128xf32>
    %341 = arith.select %338, %340, %316 : vector<8x128xi1>, vector<8x128xf32>
    %342 = arith.subf %331, %330 : vector<1x128xf32>
    %343 = vector.shape_cast %342 : vector<1x128xf32> to vector<1x128xf32>
    %344 = vector.broadcast %343 : vector<1x128xf32> to vector<8x128xf32>
    %345 = arith.select %338, %344, %320 : vector<8x128xi1>, vector<8x128xf32>
    %346 = vector.shape_cast %332 : vector<1x128xf32> to vector<1x128xf32>
    %347 = vector.broadcast %346 : vector<1x128xf32> to vector<8x128xf32>
    %348 = arith.select %338, %347, %323 : vector<8x128xi1>, vector<8x128xf32>
    %349 = arith.subf %333, %332 : vector<1x128xf32>
    %350 = vector.shape_cast %349 : vector<1x128xf32> to vector<1x128xf32>
    %351 = vector.broadcast %350 : vector<1x128xf32> to vector<8x128xf32>
    %352 = arith.select %338, %351, %327 : vector<8x128xi1>, vector<8x128xf32>
    %c14 = arith.constant 14 : index
    %c0_48 = arith.constant 0 : index
    %353 = vector.load %arg3[%c14, %c0_48] : memref<16x128xf32, #tpu.memory_space<vmem>>, vector<2x128xf32>
    %c14_49 = arith.constant 14 : index
    %c0_50 = arith.constant 0 : index
    %354 = vector.load %arg4[%c14_49, %c0_50] : memref<16x128xf32, #tpu.memory_space<vmem>>, vector<2x128xf32>
    %355 = vector.extract_strided_slice %353 {offsets = [0, 0], sizes = [1, 128], strides = [1, 1]} : vector<2x128xf32> to vector<1x128xf32>
    %356 = vector.extract_strided_slice %353 {offsets = [1, 0], sizes = [1, 128], strides = [1, 1]} : vector<2x128xf32> to vector<1x128xf32>
    %357 = vector.extract_strided_slice %354 {offsets = [0, 0], sizes = [1, 128], strides = [1, 1]} : vector<2x128xf32> to vector<1x128xf32>
    %358 = vector.extract_strided_slice %354 {offsets = [1, 0], sizes = [1, 128], strides = [1, 1]} : vector<2x128xf32> to vector<1x128xf32>
    %359 = vector.broadcast %355 : vector<1x128xf32> to vector<8x128xf32>
    %360 = arith.cmpf ogt, %0, %359 : vector<8x128xf32>
    %361 = vector.broadcast %356 : vector<1x128xf32> to vector<8x128xf32>
    %362 = arith.cmpf ole, %0, %361 : vector<8x128xf32>
    %363 = arith.andi %360, %362 : vector<8x128xi1>
    %364 = vector.shape_cast %355 : vector<1x128xf32> to vector<1x128xf32>
    %365 = vector.broadcast %364 : vector<1x128xf32> to vector<8x128xf32>
    %366 = arith.select %363, %365, %341 : vector<8x128xi1>, vector<8x128xf32>
    %367 = arith.subf %356, %355 : vector<1x128xf32>
    %368 = vector.shape_cast %367 : vector<1x128xf32> to vector<1x128xf32>
    %369 = vector.broadcast %368 : vector<1x128xf32> to vector<8x128xf32>
    %370 = arith.select %363, %369, %345 : vector<8x128xi1>, vector<8x128xf32>
    %371 = vector.shape_cast %357 : vector<1x128xf32> to vector<1x128xf32>
    %372 = vector.broadcast %371 : vector<1x128xf32> to vector<8x128xf32>
    %373 = arith.select %363, %372, %348 : vector<8x128xi1>, vector<8x128xf32>
    %374 = arith.subf %358, %357 : vector<1x128xf32>
    %375 = vector.shape_cast %374 : vector<1x128xf32> to vector<1x128xf32>
    %376 = vector.broadcast %375 : vector<1x128xf32> to vector<8x128xf32>
    %377 = arith.select %363, %376, %352 : vector<8x128xi1>, vector<8x128xf32>
    %cst_51 = arith.constant 0.000000e+00 : f32
    %378 = vector.broadcast %cst_51 : f32 to vector<8x128xf32>
    %379 = arith.cmpf oeq, %370, %378 : vector<8x128xf32>
    %cst_52 = arith.constant 1.000000e+00 : f32
    %380 = vector.broadcast %cst_52 : f32 to vector<8x128xf32>
    %381 = arith.select %379, %380, %370 : vector<8x128xi1>, vector<8x128xf32>
    %382 = arith.subf %0, %366 : vector<8x128xf32>
    %383 = arith.mulf %377, %382 : vector<8x128xf32>
    %384 = arith.divf %383, %381 : vector<8x128xf32>
    %385 = arith.addf %373, %384 : vector<8x128xf32>
    %c0_53 = arith.constant 0 : index
    %c0_54 = arith.constant 0 : index
    %386 = vector.load %arg5[%c0_53, %c0_54] : memref<8x128xf32, #tpu.memory_space<vmem>>, vector<8x128xf32>
    tpu.vector_store %arg5[%c0_53, %c0_54], %385 {strides = array<i32>} : memref<8x128xf32, #tpu.memory_space<vmem>>, vector<8x128xf32>,
    return
  }
  func.func @transform_0(%arg0: i32, %arg1: i32) -> (i32, i32) {
    %c0_i32 = arith.constant 0 : i32
    return %arg1, %arg0 : i32, i32
  }
  func.func @transform_1(%arg0: i32, %arg1: i32) -> (i32, i32) {
    %c0_i32 = arith.constant 0 : i32
    %c0_i32_0 = arith.constant 0 : i32
    return %c0_i32, %arg0 : i32, i32
  }
  func.func @transform_2(%arg0: i32, %arg1: i32) -> (i32, i32) {
    %c0_i32 = arith.constant 0 : i32
    %c0_i32_0 = arith.constant 0 : i32
    return %c0_i32, %arg0 : i32, i32
  }
  func.func @transform_3(%arg0: i32, %arg1: i32) -> (i32, i32) {
    %c0_i32 = arith.constant 0 : i32
    return %arg1, %arg0 : i32, i32
  }
}

</mosaic_0001>

<llo_original>
// kernel: tpu_custom_call.1
$region0: #{tpu_custom_call.1}
  #allocation0 [shape = 'u32[]', space=smem, size = 0x4, offset = 0x4, fixed_abs, tag = 'smem constant byte address 0x4 - core index']
  #allocation1 [shape = 'u32[72,128]{1,0:T(1,128)}', space=vmem, size = 0x9000, scoped, tag = 'internal scratch']
  %s0 = inlined_call_operand.hbm [shape: f32[8,128], index: 0, kind: input, shape index: {}]
  %s1 = inlined_call_operand.hbm [shape: f32[16,128], index: 1, kind: input, shape index: {}]
  %s2 = inlined_call_operand.hbm [shape: f32[16,128], index: 2, kind: input, shape index: {}]
  %s3 = inlined_call_operand.hbm [shape: f32[8,128], index: 3, kind: output, shape index: {}]
  %s4 = sld [smem:[#allocation0]]
  $region34: #{tpu_custom_call.1} parent=0
    _
  %s6 = ssub.s32 1, %s4
  %s7 = scalar_select 0, %s6, %s4
  $region1: #{tpu_custom_call.1} parent=0
    #allocation2 [shape = 'u8[4096]{0}', space=vmem, size = 0x1000, scoped, tag = 'input window, operand 0, single buffered']
    #allocation3 [shape = 's32[1]{0}', space=sflag, size = 0x4, scoped, tag = 'scoped memory for tpu_custom_call.1']
    #allocation4 [shape = 's32[1]{0}', space=sflag, size = 0x4, scoped, tag = 'scoped memory for tpu_custom_call.1']
    #allocation5 [shape = 'u8[8192]{0}', space=vmem, size = 0x2000, scoped, tag = 'input window, operand 1, single buffered']
    #allocation6 [shape = 's32[1]{0}', space=sflag, size = 0x4, scoped, tag = 'scoped memory for tpu_custom_call.1']
    #allocation7 [shape = 'u8[8192]{0}', space=vmem, size = 0x2000, scoped, tag = 'input window, operand 2, single buffered']
    #allocation8 [shape = 'u8[4096]{0}', space=vmem, size = 0x1000, scoped, tag = 'output window, operand 0, single buffered']
    %8 = vsyncpa [#allocation3], 0
    %9 = vsyncpa [#allocation6], 0
    %10 = vsyncpa [#allocation4], 0
    // Predicated region
    $region2: #{tpu_custom_call.1} parent=1 // pred_check
      _
    $region3: #{tpu_custom_call.1} parent=1 // pred_check_branch
      %12 = sbr.rel (0) target = $region5
    $region4: #{tpu_custom_call.1} parent=1 // pred_region
      %14 = vsyncadd [#allocation3], 0
      %s16 = sshll.u32 %s0, 4
      %s17 = int_to_ptr.hbm [resolvable:$true] %s16
      %s18 = sshll.u32 [#allocation2], 4
      %s19 = int_to_ptr.vmem [resolvable:$true] %s18
      %21 = dma.hbm_to_vmem [thread:$0]  %s17, 128, %s19, [#allocation3]
    $region5: #{tpu_custom_call.1} parent=1 // pred_fallthru
      _
    // Predicated region
    $region6: #{tpu_custom_call.1} parent=1 // pred_check
      _
    $region7: #{tpu_custom_call.1} parent=1 // pred_check_branch
      %23 = sbr.rel (0) target = $region9
    $region8: #{tpu_custom_call.1} parent=1 // pred_region
      %25 = vsyncadd [#allocation6], 0
      %s26 = sshll.u32 %s1, 4
      %s27 = int_to_ptr.hbm [resolvable:$true] %s26
      %s28 = sshll.u32 [#allocation5], 4
      %s29 = int_to_ptr.vmem [resolvable:$true] %s28
      %34 = dma.hbm_to_vmem [thread:$0]  %s27, 256, %s29, [#allocation6], 128, 128, 8
    $region9: #{tpu_custom_call.1} parent=1 // pred_fallthru
      _
    // Predicated region
    $region10: #{tpu_custom_call.1} parent=1 // pred_check
      _
    $region11: #{tpu_custom_call.1} parent=1 // pred_check_branch
      %36 = sbr.rel (0) target = $region13
    $region12: #{tpu_custom_call.1} parent=1 // pred_region
      %38 = vsyncadd [#allocation6], 0
      %s39 = sshll.u32 %s2, 4
      %s40 = int_to_ptr.hbm [resolvable:$true] %s39
      %s41 = sshll.u32 [#allocation7], 4
      %s42 = int_to_ptr.vmem [resolvable:$true] %s41
      %47 = dma.hbm_to_vmem [thread:$0]  %s40, 256, %s42, [#allocation6], 128, 128, 8
    $region13: #{tpu_custom_call.1} parent=1 // pred_fallthru
      _
    // Predicated region
    $region14: #{tpu_custom_call.1} parent=1 // pred_check
      _
    $region15: #{tpu_custom_call.1} parent=1 // pred_check_branch
      %49 = sbr.rel (0) target = $region17
    $region16: #{tpu_custom_call.1} parent=1 // pred_region
      %51 = dma.done [#allocation3], 128
    $region17: #{tpu_custom_call.1} parent=1 // pred_fallthru
      _
    // Predicated region
    $region18: #{tpu_custom_call.1} parent=1 // pred_check
      _
    $region19: #{tpu_custom_call.1} parent=1 // pred_check_branch
      %53 = sbr.rel (0) target = $region21
    $region20: #{tpu_custom_call.1} parent=1 // pred_region
      %55 = dma.done [#allocation6], 256
    $region21: #{tpu_custom_call.1} parent=1 // pred_fallthru
      _
    // Predicated region
    $region22: #{tpu_custom_call.1} parent=1 // pred_check
      _
    $region23: #{tpu_custom_call.1} parent=1 // pred_check_branch
      %57 = sbr.rel (0) target = $region25
    $region24: #{tpu_custom_call.1} parent=1 // pred_region
      %59 = dma.done [#allocation6], 256
    $region25: #{tpu_custom_call.1} parent=1 // pred_fallthru
      _
    %v60 = vld [vmem:[#allocation2] sm:$0xff]
    %v61 = vld [vmem:[#allocation5] sm:$0x1]
    %v62 = vld [vmem:[#allocation5 + $0x1] sm:$0x1]
    %v63 = vld [vmem:[#allocation7] sm:$0x1]
    %v64 = vld [vmem:[#allocation7 + $0x1] sm:$0x1]
    %v65 = vperm.slane %v61, 0
    %vm66 = vcmp.gt.f32.partialorder %v60, %v65
    %v67 = vperm.slane %v62, 0
    %vm68 = vcmp.le.f32.partialorder %v60, %v67
    %vm69 = vmand %vm66, %vm68
    %vm70 = vcmp.eq.f32.partialorder %v60, %v65
    %vm71 = vmor %vm69, %vm70
    %v72 = vsel %vm71, %v65, 0.0
    %v73 = vsub.f32 %v62, %v61
    %v74 = vperm.slane %v73, 0
    %v75 = vsel %vm71, %v74, 0.0
    %v76 = vperm.slane %v63, 0
    %v77 = vsel %vm71, %v76, 0.0
    %v78 = vsub.f32 %v64, %v63
    %v79 = vperm.slane %v78, 0
    %v80 = vsel %vm71, %v79, 0.0
    %v81 = vld [vmem:[#allocation5 + $0x1] sm:$0x3]
    %v82 = vld [vmem:[#allocation7 + $0x1] sm:$0x3]
    %v83 = vperm.slane %v81, 0
    %vm84 = vcmp.gt.f32.partialorder %v60, %v83
    %v85 = vperm.slane %v81, 1
    %vm86 = vcmp.le.f32.partialorder %v60, %v85
    %vm87 = vmand %vm84, %vm86
    %v88 = vsel %vm87, %v83, %v72
    %v90 = vrot.slane %v81, 7
    %v92 = vsub.f32 %v81, %v90
    %v93 = vperm.slane %v92, 1
    %v94 = vsel %vm87, %v93, %v75
    %v95 = vperm.slane %v82, 0
    %v96 = vsel %vm87, %v95, %v77
    %v98 = vrot.slane %v82, 7
    %v100 = vsub.f32 %v82, %v98
    %v101 = vperm.slane %v100, 1
    %v102 = vsel %vm87, %v101, %v80
    %v103 = vld [vmem:[#allocation5 + $0x2] sm:$0x3]
    %v104 = vld [vmem:[#allocation7 + $0x2] sm:$0x3]
    %v105 = vperm.slane %v103, 0
    %vm106 = vcmp.gt.f32.partialorder %v60, %v105
    %v107 = vperm.slane %v103, 1
    %vm108 = vcmp.le.f32.partialorder %v60, %v107
    %vm109 = vmand %vm106, %vm108
    %v110 = vsel %vm109, %v105, %v88
    %v112 = vrot.slane %v103, 7
    %v114 = vsub.f32 %v103, %v112
    %v115 = vperm.slane %v114, 1
    %v116 = vsel %vm109, %v115, %v94
    %v117 = vperm.slane %v104, 0
    %v118 = vsel %vm109, %v117, %v96
    %v120 = vrot.slane %v104, 7
    %v122 = vsub.f32 %v104, %v120
    %v123 = vperm.slane %v122, 1
    %v124 = vsel %vm109, %v123, %v102
    %v125 = vld [vmem:[#allocation5 + $0x3] sm:$0x3]
    %v126 = vld [vmem:[#allocation7 + $0x3] sm:$0x3]
    %v127 = vperm.slane %v125, 0
    %vm128 = vcmp.gt.f32.partialorder %v60, %v127
    %v129 = vperm.slane %v125, 1
    %vm130 = vcmp.le.f32.partialorder %v60, %v129
    %vm131 = vmand %vm128, %vm130
    %v132 = vsel %vm131, %v127, %v110
    %v134 = vrot.slane %v125, 7
    %v136 = vsub.f32 %v125, %v134
    %v137 = vperm.slane %v136, 1
    %v138 = vsel %vm131, %v137, %v116
    %v139 = vperm.slane %v126, 0
    %v140 = vsel %vm131, %v139, %v118
    %v142 = vrot.slane %v126, 7
    %v144 = vsub.f32 %v126, %v142
    %v145 = vperm.slane %v144, 1
    %v146 = vsel %vm131, %v145, %v124
    %v147 = vld [vmem:[#allocation5 + $0x4] sm:$0x3]
    %v148 = vld [vmem:[#allocation7 + $0x4] sm:$0x3]
    %v149 = vperm.slane %v147, 0
    %vm150 = vcmp.gt.f32.partialorder %v60, %v149
    %v151 = vperm.slane %v147, 1
    %vm152 = vcmp.le.f32.partialorder %v60, %v151
    %vm153 = vmand %vm150, %vm152
    %v154 = vsel %vm153, %v149, %v132
    %v156 = vrot.slane %v147, 7
    %v158 = vsub.f32 %v147, %v156
    %v159 = vperm.slane %v158, 1
    %v160 = vsel %vm153, %v159, %v138
    %v161 = vperm.slane %v148, 0
    %v162 = vsel %vm153, %v161, %v140
    %v164 = vrot.slane %v148, 7
    %v166 = vsub.f32 %v148, %v164
    %v167 = vperm.slane %v166, 1
    %v168 = vsel %vm153, %v167, %v146
    %v169 = vld [vmem:[#allocation5 + $0x5] sm:$0x3]
    %v170 = vld [vmem:[#allocation7 + $0x5] sm:$0x3]
    %v171 = vperm.slane %v169, 0
    %vm172 = vcmp.gt.f32.partialorder %v60, %v171
    %v173 = vperm.slane %v169, 1
    %vm174 = vcmp.le.f32.partialorder %v60, %v173
    %vm175 = vmand %vm172, %vm174
    %v176 = vsel %vm175, %v171, %v154
    %v178 = vrot.slane %v169, 7
    %v180 = vsub.f32 %v169, %v178
    %v181 = vperm.slane %v180, 1
    %v182 = vsel %vm175, %v181, %v160
    %v183 = vperm.slane %v170, 0
    %v184 = vsel %vm175, %v183, %v162
    %v186 = vrot.slane %v170, 7
    %v188 = vsub.f32 %v170, %v186
    %v189 = vperm.slane %v188, 1
    %v190 = vsel %vm175, %v189, %v168
    %v191 = vld [vmem:[#allocation5 + $0x6] sm:$0x3]
    %v192 = vld [vmem:[#allocation7 + $0x6] sm:$0x3]
    %v193 = vperm.slane %v191, 0
    %vm194 = vcmp.gt.f32.partialorder %v60, %v193
    %v195 = vperm.slane %v191, 1
    %vm196 = vcmp.le.f32.partialorder %v60, %v195
    %vm197 = vmand %vm194, %vm196
    %v198 = vsel %vm197, %v193, %v176
    %v200 = vrot.slane %v191, 7
    %v202 = vsub.f32 %v191, %v200
    %v203 = vperm.slane %v202, 1
    %v204 = vsel %vm197, %v203, %v182
    %v205 = vperm.slane %v192, 0
    %v206 = vsel %vm197, %v205, %v184
    %v208 = vrot.slane %v192, 7
    %v210 = vsub.f32 %v192, %v208
    %v211 = vperm.slane %v210, 1
    %v212 = vsel %vm197, %v211, %v190
    %v213 = vld [vmem:[#allocation5 + $0x7] sm:$0x3]
    %v214 = vld [vmem:[#allocation7 + $0x7] sm:$0x3]
    %v215 = vperm.slane %v213, 0
    %vm216 = vcmp.gt.f32.partialorder %v60, %v215
    %v217 = vperm.slane %v213, 1
    %vm218 = vcmp.le.f32.partialorder %v60, %v217
    %vm219 = vmand %vm216, %vm218
    %v220 = vsel %vm219, %v215, %v198
    %v222 = vrot.slane %v213, 7
    %v224 = vsub.f32 %v213, %v222
    %v225 = vperm.slane %v224, 1
    %v226 = vsel %vm219, %v225, %v204
    %v227 = vperm.slane %v214, 0
    %v228 = vsel %vm219, %v227, %v206
    %v230 = vrot.slane %v214, 7
    %v232 = vsub.f32 %v214, %v230
    %v233 = vperm.slane %v232, 1
    %v234 = vsel %vm219, %v233, %v212
    %v235 = vld [vmem:[#allocation5 + $0x8] sm:$0x3]
    %v236 = vld [vmem:[#allocation7 + $0x8] sm:$0x3]
    %v237 = vperm.slane %v235, 0
    %vm238 = vcmp.gt.f32.partialorder %v60, %v237
    %v239 = vperm.slane %v235, 1
    %vm240 = vcmp.le.f32.partialorder %v60, %v239
    %vm241 = vmand %vm238, %vm240
    %v242 = vsel %vm241, %v237, %v220
    %v244 = vrot.slane %v235, 7
    %v246 = vsub.f32 %v235, %v244
    %v247 = vperm.slane %v246, 1
    %v248 = vsel %vm241, %v247, %v226
    %v249 = vperm.slane %v236, 0
    %v250 = vsel %vm241, %v249, %v228
    %v252 = vrot.slane %v236, 7
    %v254 = vsub.f32 %v236, %v252
    %v255 = vperm.slane %v254, 1
    %v256 = vsel %vm241, %v255, %v234
    %v257 = vld [vmem:[#allocation5 + $0x9] sm:$0x3]
    %v258 = vld [vmem:[#allocation7 + $0x9] sm:$0x3]
    %v259 = vperm.slane %v257, 0
    %vm260 = vcmp.gt.f32.partialorder %v60, %v259
    %v261 = vperm.slane %v257, 1
    %vm262 = vcmp.le.f32.partialorder %v60, %v261
    %vm263 = vmand %vm260, %vm262
    %v264 = vsel %vm263, %v259, %v242
    %v266 = vrot.slane %v257, 7
    %v268 = vsub.f32 %v257, %v266
    %v269 = vperm.slane %v268, 1
    %v270 = vsel %vm263, %v269, %v248
    %v271 = vperm.slane %v258, 0
    %v272 = vsel %vm263, %v271, %v250
    %v274 = vrot.slane %v258, 7
    %v276 = vsub.f32 %v258, %v274
    %v277 = vperm.slane %v276, 1
    %v278 = vsel %vm263, %v277, %v256
    %v279 = vld [vmem:[#allocation5 + $0xa] sm:$0x3]
    %v280 = vld [vmem:[#allocation7 + $0xa] sm:$0x3]
    %v281 = vperm.slane %v279, 0
    %vm282 = vcmp.gt.f32.partialorder %v60, %v281
    %v283 = vperm.slane %v279, 1
    %vm284 = vcmp.le.f32.partialorder %v60, %v283
    %vm285 = vmand %vm282, %vm284
    %v286 = vsel %vm285, %v281, %v264
    %v288 = vrot.slane %v279, 7
    %v290 = vsub.f32 %v279, %v288
    %v291 = vperm.slane %v290, 1
    %v292 = vsel %vm285, %v291, %v270
    %v293 = vperm.slane %v280, 0
    %v294 = vsel %vm285, %v293, %v272
    %v296 = vrot.slane %v280, 7
    %v298 = vsub.f32 %v280, %v296
    %v299 = vperm.slane %v298, 1
    %v300 = vsel %vm285, %v299, %v278
    %v301 = vld [vmem:[#allocation5 + $0xb] sm:$0x3]
    %v302 = vld [vmem:[#allocation7 + $0xb] sm:$0x3]
    %v303 = vperm.slane %v301, 0
    %vm304 = vcmp.gt.f32.partialorder %v60, %v303
    %v305 = vperm.slane %v301, 1
    %vm306 = vcmp.le.f32.partialorder %v60, %v305
    %vm307 = vmand %vm304, %vm306
    %v308 = vsel %vm307, %v303, %v286
    %v310 = vrot.slane %v301, 7
    %v312 = vsub.f32 %v301, %v310
    %v313 = vperm.slane %v312, 1
    %v314 = vsel %vm307, %v313, %v292
    %v315 = vperm.slane %v302, 0
    %v316 = vsel %vm307, %v315, %v294
    %v318 = vrot.slane %v302, 7
    %v320 = vsub.f32 %v302, %v318
    %v321 = vperm.slane %v320, 1
    %v322 = vsel %vm307, %v321, %v300
    %v323 = vld [vmem:[#allocation5 + $0xc] sm:$0x3]
    %v324 = vld [vmem:[#allocation7 + $0xc] sm:$0x3]
    %v325 = vperm.slane %v323, 0
    %vm326 = vcmp.gt.f32.partialorder %v60, %v325
    %v327 = vperm.slane %v323, 1
    %vm328 = vcmp.le.f32.partialorder %v60, %v327
    %vm329 = vmand %vm326, %vm328
    %v330 = vsel %vm329, %v325, %v308
    %v332 = vrot.slane %v323, 7
    %v334 = vsub.f32 %v323, %v332
    %v335 = vperm.slane %v334, 1
    %v336 = vsel %vm329, %v335, %v314
    %v337 = vperm.slane %v324, 0
    %v338 = vsel %vm329, %v337, %v316
    %v340 = vrot.slane %v324, 7
    %v342 = vsub.f32 %v324, %v340
    %v343 = vperm.slane %v342, 1
    %v344 = vsel %vm329, %v343, %v322
    %v345 = vld [vmem:[#allocation5 + $0xd] sm:$0x3]
    %v346 = vld [vmem:[#allocation7 + $0xd] sm:$0x3]
    %v347 = vperm.slane %v345, 0
    %vm348 = vcmp.gt.f32.partialorder %v60, %v347
    %v349 = vperm.slane %v345, 1
    %vm350 = vcmp.le.f32.partialorder %v60, %v349
    %vm351 = vmand %vm348, %vm350
    %v352 = vsel %vm351, %v347, %v330
    %v354 = vrot.slane %v345, 7
    %v356 = vsub.f32 %v345, %v354
    %v357 = vperm.slane %v356, 1
    %v358 = vsel %vm351, %v357, %v336
    %v359 = vperm.slane %v346, 0
    %v360 = vsel %vm351, %v359, %v338
    %v362 = vrot.slane %v346, 7
    %v364 = vsub.f32 %v346, %v362
    %v365 = vperm.slane %v364, 1
    %v366 = vsel %vm351, %v365, %v344
    %v367 = vld [vmem:[#allocation5 + $0xe] sm:$0x3]
    %v368 = vld [vmem:[#allocation7 + $0xe] sm:$0x3]
    %v369 = vperm.slane %v367, 0
    %vm370 = vcmp.gt.f32.partialorder %v60, %v369
    %v371 = vperm.slane %v367, 1
    %vm372 = vcmp.le.f32.partialorder %v60, %v371
    %vm373 = vmand %vm370, %vm372
    %v374 = vsel %vm373, %v369, %v352
    %v376 = vrot.slane %v367, 7
    %v378 = vsub.f32 %v367, %v376
    %v379 = vperm.slane %v378, 1
    %v380 = vsel %vm373, %v379, %v358
    %v381 = vperm.slane %v368, 0
    %v382 = vsel %vm373, %v381, %v360
    %v384 = vrot.slane %v368, 7
    %v386 = vsub.f32 %v368, %v384
    %v387 = vperm.slane %v386, 1
    %v388 = vsel %vm373, %v387, %v366
    %vm389 = vcmp.eq.f32.partialorder %v380, 0.0
    %v390 = vsel %vm389, 1.0, %v380
    %v391 = vsub.f32 %v60, %v374
    %v392 = vmul.f32 %v388, %v391
    %v393 = vrcp.pop %v390
    %v394 = vmul.f32 %v390, %v393
    %v395 = vsub.f32 1.0, %v394
    %v396 = vmul.f32 %v393, %v395
    %v397 = vadd.f32 %v393, %v396
    %vm398 = vweird.f32 %v390
    %vm399 = vweird.f32 %v393
    %vm400 = vmor %vm398, %vm399
    %v401 = vsel %vm400, %v393, %v397
    %v402 = vand.u32 2147483647, %v390
    %vm403 = vcmp.eq.f32.partialorder %v402, 8.507059e+37
    %v404 = vand.u32 %v390, 2147483648
    %v405 = vor.u32 1.1754944e-38, %v404
    %v406 = vsel %vm403, %v405, %v401
    %v407 = vmul.f32 %v392, %v406
    %v408 = vadd.f32 %v382, %v407
    %409 = vst [vmem:[#allocation8] sm:$0xff] %v408
    // Predicated region
    $region26: #{tpu_custom_call.1} parent=1 // pred_check
      _
    $region27: #{tpu_custom_call.1} parent=1 // pred_check_branch
      %411 = sbr.rel (0) target = $region29
    $region28: #{tpu_custom_call.1} parent=1 // pred_region
      %413 = vsyncadd [#allocation4], 0
      %s415 = sshll.u32 [#allocation8], 4
      %s416 = int_to_ptr.vmem [resolvable:$true] %s415
      %s417 = sshll.u32 %s3, 4
      %s418 = int_to_ptr.hbm [resolvable:$true] %s417
      %420 = dma.vmem_to_hbm [thread:$0]  %s416, 128, %s418, [#allocation4]
    $region29: #{tpu_custom_call.1} parent=1 // pred_fallthru
      _
    // Predicated region
    $region30: #{tpu_custom_call.1} parent=1 // pred_check
      _
    $region31: #{tpu_custom_call.1} parent=1 // pred_check_branch
      %422 = sbr.rel (0) target = $region33
    $region32: #{tpu_custom_call.1} parent=1 // pred_region
      %424 = dma.done [#allocation4], 128
    $region33: #{tpu_custom_call.1} parent=1 // pred_fallthru
      _
    %425 = vsyncpa [#allocation3], 1
    %426 = vsyncpa [#allocation6], 1
    %427 = vsyncpa [#allocation4], 1

</llo_original>
